<compile_context>
chip_gen: v5e
topology: v5e:2x2
jax: 0.10.0
libtpu: 0.0.40
codegen_flags: <defaults>
</compile_context>

<pallas_src>
import functools

import jax
import jax.numpy as jnp
from jax.experimental import pallas as pl
from jax.experimental.pallas import tpu as pltpu

# The PyTorch module references an external constant FC_NEURON_LISTS
# ("3 layer perceptron"). Defined deterministically here.
FC_NEURON_LISTS = [32, 64, 48, 16]
N_LAYERS = len(FC_NEURON_LISTS) - 1

LANE = 128     # padded feature width of the stacked weights / biases
SUBLANE = 8    # one f32 (8, 128) tile for the bias stack
MAX_TILE = 2048  # max batch rows per grid step (keeps double-buffered VMEM small)


# ----------------------------------------------------------------------------
# Kernel: fused (Linear -> ReLU) x 3.  x/out are at logical widths (32 / 16);
# weights are lane-padded to 128 and stacked so a single operand carries all
# three layers.  The PyTorch FC applies ReLU after the final Linear as well.
# ----------------------------------------------------------------------------
def _fc_fused_kernel(x_ref, w_ref, b_ref, o_ref):
    dims = FC_NEURON_LISTS
    b = b_ref[...]                                   # (8, 128), rows 0..2 used

    # Layer 0: x is unpadded (tb, 32) -> use only the first 32 weight rows.
    w0 = w_ref[0]                                    # (128, 128)
    h = jnp.dot(x_ref[...], w0[:dims[0], :],
                preferred_element_type=jnp.float32)  # (tb, 128)
    h = jnp.maximum(h + b[0:1, :], 0.0)

    # Layers 1..N-1: padded lanes of h are exactly zero, so full 128x128 dots
    # are numerically identical to the logical 64x48 / 48x16 ones.
    for l in range(1, N_LAYERS):
        h = jnp.dot(h, w_ref[l], preferred_element_type=jnp.float32)
        h = jnp.maximum(h + b[l:l + 1, :], 0.0)

    o_ref[...] = h[:, :dims[-1]].astype(o_ref.dtype)


def _pick_tile(batch):
    """Rows per grid step. Small batches -> whole array (grid=(1,))."""
    if batch <= MAX_TILE:
        return batch
    for tb in (2048, 1024, 512, 256, 128, 64, 32, 16, 8):
        if batch % tb == 0:
            return tb
    return batch  # odd oversized batch: fall back to whole-array blocks


def _fc_fused_call(x, w_stack, b_stack, tb):
    batch, d_in = x.shape
    d_out = FC_NEURON_LISTS[-1]
    grid = (batch // tb,)

    # Advisory cost from *logical* dims (the call is genuinely tiny).
    logical_w = sum(FC_NEURON_LISTS[i] * FC_NEURON_LISTS[i + 1]
                    for i in range(N_LAYERS))
    logical_b = sum(FC_NEURON_LISTS[1:])
    flops = 2 * batch * logical_w
    bytes_accessed = 4 * (batch * d_in + batch * d_out + logical_w + logical_b)

    return pl.pallas_call(
        _fc_fused_kernel,
        out_shape=jax.ShapeDtypeStruct((batch, d_out), x.dtype),
        grid=grid,
        in_specs=[
            pl.BlockSpec((tb, d_in), lambda i: (i, 0)),
            # Constant index maps: weights/biases fetched once, VMEM-resident.
            pl.BlockSpec((N_LAYERS, LANE, LANE), lambda i: (0, 0, 0)),
            pl.BlockSpec((SUBLANE, LANE), lambda i: (0, 0)),
        ],
        out_specs=pl.BlockSpec((tb, d_out), lambda i: (i, 0)),
        compiler_params=pltpu.CompilerParams(
            dimension_semantics=("parallel",)),
        cost_estimate=pl.CostEstimate(
            flops=flops, transcendentals=0, bytes_accessed=bytes_accessed),
    )(x, w_stack, b_stack)


# ----------------------------------------------------------------------------
# Params: torch-style init, then one-time pack into 2 padded operands.
# ----------------------------------------------------------------------------
def init_fc_params(key, neuron_lists):
    """Deterministic init mirroring nn.Linear's U(-1/sqrt(fan_in), .)."""
    params = []
    for i in range(len(neuron_lists) - 1):
        d_in, d_out = neuron_lists[i], neuron_lists[i + 1]
        key, kw, kb = jax.random.split(key, 3)
        bound = 1.0 / (d_in ** 0.5)
        # torch weight is (out, in); store transposed (in, out) for x @ W.
        w_t = jax.random.uniform(kw, (d_in, d_out), jnp.float32, -bound, bound)
        b = jax.random.uniform(kb, (d_out,), jnp.float32, -bound, bound)
        params.append((w_t, b))
    return params


def pack_fc_params(params):
    """Zero-pad and stack weights -> (3,128,128), biases -> (8,128)."""
    w_stack = jnp.zeros((N_LAYERS, LANE, LANE), jnp.float32)
    b_stack = jnp.zeros((SUBLANE, LANE), jnp.float32)
    for i, (w_t, b) in enumerate(params):
        d_in, d_out = w_t.shape
        w_stack = w_stack.at[i, :d_in, :d_out].set(w_t)
        b_stack = b_stack.at[i, :d_out].set(b)
    return w_stack, b_stack


# ----------------------------------------------------------------------------
# Forward
# ----------------------------------------------------------------------------
@functools.partial(jax.jit, static_argnames=("tb",))
def fc_forward(x, w_stack, b_stack, tb=None):
    """x: (batch, 32) -> (batch, 16).  One fused Pallas kernel, no pad/slice."""
    batch = x.shape[0]
    if tb is None:
        tb = _pick_tile(batch)
    return _fc_fused_call(x, w_stack, b_stack, tb)


def fc_forward_ref(x, params):
    """Pure-JAX reference (unpadded params) for correctness check."""
    for w_t, b in params:
        x = jnp.maximum(x @ w_t + b, 0.0)
    return x


if __name__ == "__main__":
    key = jax.random.PRNGKey(0)
    params = init_fc_params(jax.random.PRNGKey(0), FC_NEURON_LISTS)
    w_stack, b_stack = pack_fc_params(params)

    # --- small batch: whole-array blocks, grid=(1,) -------------------------
    key, kx = jax.random.split(key)
    batch = 8
    x = jax.random.normal(kx, (batch, FC_NEURON_LISTS[0]), jnp.float32)

    out = jax.block_until_ready(fc_forward(x, w_stack, b_stack))
    ref = fc_forward_ref(x, params)
    assert out.shape == (batch, FC_NEURON_LISTS[-1]), out.shape
    assert jnp.allclose(out, ref, atol=1e-5, rtol=1e-5), "mismatch vs reference"

    # --- exercise the batch-gridded path (still small: 64 rows, 4 steps) ----
    key, kx2 = jax.random.split(key)
    x2 = jax.random.normal(kx2, (64, FC_NEURON_LISTS[0]), jnp.float32)
    out2 = jax.block_until_ready(fc_forward(x2, w_stack, b_stack, tb=16))
    ref2 = fc_forward_ref(x2, params)
    assert jnp.allclose(out2, ref2, atol=1e-5, rtol=1e-5), "grid path mismatch"

    print("KERNEL_OK")
</pallas_src>

<mosaic_0001>
module attributes {stable_mosaic.version = 11 : i64} {
  func.func @_fc_fused_kernel(%arg0: i32, %arg1: memref<8x32xf32, #tpu.memory_space<vmem>>, %arg2: memref<3x128x128xf32, #tpu.memory_space<vmem>>, %arg3: memref<8x128xf32, #tpu.memory_space<vmem>>, %arg4: memref<8x16xf32, #tpu.memory_space<vmem>>) attributes {dimension_semantics = [#tpu.dimension_semantics<parallel>], iteration_bounds = array<i64: 1>, scalar_prefetch = 0 : i64, scratch_operands = 0 : i64, tpu.core_type = #tpu.core_type<tc>, window_params = [{transform_indices = @transform_0, window_bounds = array<i64: 8, 32>}, {pipeline_mode = #tpu.pipeline_mode<synchronous>, transform_indices = @transform_1, window_bounds = array<i64: 3, 128, 128>}, {pipeline_mode = #tpu.pipeline_mode<synchronous>, transform_indices = @transform_2, window_bounds = array<i64: 8, 128>}, {transform_indices = @transform_3, window_bounds = array<i64: 8, 16>}]} {
    %c0 = arith.constant 0 : index
    %c0_0 = arith.constant 0 : index
    %0 = vector.load %arg3[%c0, %c0_0] : memref<8x128xf32, #tpu.memory_space<vmem>>, vector<8x128xf32>
    %c0_1 = arith.constant 0 : index
    %c0_2 = arith.constant 0 : index
    %c0_3 = arith.constant 0 : index
    %1 = vector.load %arg2[%c0_1, %c0_2, %c0_3] : memref<3x128x128xf32, #tpu.memory_space<vmem>>, vector<1x128x128xf32>
    %2 = vector.shape_cast %1 : vector<1x128x128xf32> to vector<128x128xf32>
    %c0_4 = arith.constant 0 : index
    %c0_5 = arith.constant 0 : index
    %3 = vector.load %arg1[%c0_4, %c0_5] : memref<8x32xf32, #tpu.memory_space<vmem>>, vector<8x32xf32>
    %4 = vector.extract_strided_slice %2 {offsets = [0, 0], sizes = [32, 128], strides = [1, 1]} : vector<128x128xf32> to vector<32x128xf32>
    %cst = arith.constant dense<0.000000e+00> : vector<8x128xf32>
    %5 = tpu.matmul %3, %4, %cst {dimension_numbers = #tpu.dot_dimension_numbers<[1], [0], [0], [1], [0, 0, 1, 1], [], []>} : vector<8x32xf32>, vector<32x128xf32>, vector<8x128xf32> -> vector<8x128xf32>
    %6 = vector.extract_strided_slice %0 {offsets = [0, 0], sizes = [1, 128], strides = [1, 1]} : vector<8x128xf32> to vector<1x128xf32>
    %7 = vector.broadcast %6 : vector<1x128xf32> to vector<8x128xf32>
    %8 = arith.addf %5, %7 : vector<8x128xf32>
    %cst_6 = arith.constant 0.000000e+00 : f32
    %9 = vector.broadcast %cst_6 : f32 to vector<8x128xf32>
    %10 = arith.maximumf %8, %9 : vector<8x128xf32>
    %c1 = arith.constant 1 : index
    %c0_7 = arith.constant 0 : index
    %c0_8 = arith.constant 0 : index
    %11 = vector.load %arg2[%c1, %c0_7, %c0_8] : memref<3x128x128xf32, #tpu.memory_space<vmem>>, vector<1x128x128xf32>
    %12 = vector.shape_cast %11 : vector<1x128x128xf32> to vector<128x128xf32>
    %cst_9 = arith.constant dense<0.000000e+00> : vector<8x128xf32>
    %13 = tpu.matmul %10, %12, %cst_9 {dimension_numbers = #tpu.dot_dimension_numbers<[1], [0], [0], [1], [0, 0, 1, 1], [], []>} : vector<8x128xf32>, vector<128x128xf32>, vector<8x128xf32> -> vector<8x128xf32>
    %14 = vector.extract_strided_slice %0 {offsets = [1, 0], sizes = [1, 128], strides = [1, 1]} : vector<8x128xf32> to vector<1x128xf32>
    %15 = vector.broadcast %14 : vector<1x128xf32> to vector<8x128xf32>
    %16 = arith.addf %13, %15 : vector<8x128xf32>
    %cst_10 = arith.constant 0.000000e+00 : f32
    %17 = vector.broadcast %cst_10 : f32 to vector<8x128xf32>
    %18 = arith.maximumf %16, %17 : vector<8x128xf32>
    %c2 = arith.constant 2 : index
    %c0_11 = arith.constant 0 : index
    %c0_12 = arith.constant 0 : index
    %19 = vector.load %arg2[%c2, %c0_11, %c0_12] : memref<3x128x128xf32, #tpu.memory_space<vmem>>, vector<1x128x128xf32>
    %20 = vector.shape_cast %19 : vector<1x128x128xf32> to vector<128x128xf32>
    %cst_13 = arith.constant dense<0.000000e+00> : vector<8x128xf32>
    %21 = tpu.matmul %18, %20, %cst_13 {dimension_numbers = #tpu.dot_dimension_numbers<[1], [0], [0], [1], [0, 0, 1, 1], [], []>} : vector<8x128xf32>, vector<128x128xf32>, vector<8x128xf32> -> vector<8x128xf32>
    %22 = vector.extract_strided_slice %0 {offsets = [2, 0], sizes = [1, 128], strides = [1, 1]} : vector<8x128xf32> to vector<1x128xf32>
    %23 = vector.broadcast %22 : vector<1x128xf32> to vector<8x128xf32>
    %24 = arith.addf %21, %23 : vector<8x128xf32>
    %cst_14 = arith.constant 0.000000e+00 : f32
    %25 = vector.broadcast %cst_14 : f32 to vector<8x128xf32>
    %26 = arith.maximumf %24, %25 : vector<8x128xf32>
    %27 = vector.extract_strided_slice %26 {offsets = [0, 0], sizes = [8, 16], strides = [1, 1]} : vector<8x128xf32> to vector<8x16xf32>
    %c0_15 = arith.constant 0 : index
    %c0_16 = arith.constant 0 : index
    %28 = vector.load %arg4[%c0_15, %c0_16] : memref<8x16xf32, #tpu.memory_space<vmem>>, vector<8x16xf32>
    tpu.vector_store %arg4[%c0_15, %c0_16], %27 {strides = array<i32>} : memref<8x16xf32, #tpu.memory_space<vmem>>, vector<8x16xf32>,
    return
  }
  func.func @transform_0(%arg0: i32) -> (i32, i32) {
    %c0_i32 = arith.constant 0 : i32
    %c0_i32_0 = arith.constant 0 : i32
    return %arg0, %c0_i32 : i32, i32
  }
  func.func @transform_1(%arg0: i32) -> (i32, i32, i32) {
    %c0_i32 = arith.constant 0 : i32
    %c0_i32_0 = arith.constant 0 : i32
    %c0_i32_1 = arith.constant 0 : i32
    %c0_i32_2 = arith.constant 0 : i32
    return %c0_i32, %c0_i32_0, %c0_i32_1 : i32, i32, i32
  }
  func.func @transform_2(%arg0: i32) -> (i32, i32) {
    %c0_i32 = arith.constant 0 : i32
    %c0_i32_0 = arith.constant 0 : i32
    %c0_i32_1 = arith.constant 0 : i32
    return %c0_i32, %c0_i32_0 : i32, i32
  }
  func.func @transform_3(%arg0: i32) -> (i32, i32) {
    %c0_i32 = arith.constant 0 : i32
    %c0_i32_0 = arith.constant 0 : i32
    return %arg0, %c0_i32 : i32, i32
  }
}

</mosaic_0001>

<llo_original>
// kernel: fc_forward.1
$region0: #{fc_forward.1}
  #allocation0 [shape = 'u32[]', space=smem, size = 0x4, offset = 0x4, fixed_abs, tag = 'smem constant byte address 0x4 - core index']
  #allocation1 [shape = 'u32[72,128]{1,0:T(1,128)}', space=vmem, size = 0x9000, scoped, tag = 'internal scratch']
  %s0 = inlined_call_operand.hbm [shape: f32[8,32], index: 0, kind: input, shape index: {}]
  %s1 = inlined_call_operand.hbm [shape: f32[3,128,128], index: 1, kind: input, shape index: {}]
  %s2 = inlined_call_operand.hbm [shape: f32[8,128], index: 2, kind: input, shape index: {}]
  %s3 = inlined_call_operand.hbm [shape: f32[8,16], index: 3, kind: output, shape index: {}]
  %s4 = sld [smem:[#allocation0]]
  $region34: #{fc_forward.1} parent=0
    _
  %s6 = ssub.s32 1, %s4
  %s7 = scalar_select 0, %s6, %s4
  $region1: #{fc_forward.1} parent=0
    #allocation2 [shape = 'u8[4096]{0}', space=vmem, size = 0x1000, scoped, tag = 'input window, operand 0, single buffered']
    #allocation3 [shape = 's32[1]{0}', space=sflag, size = 0x4, scoped, tag = 'scoped memory for fc_forward.1']
    #allocation4 [shape = 's32[1]{0}', space=sflag, size = 0x4, scoped, tag = 'scoped memory for fc_forward.1']
    #allocation5 [shape = 'u8[196608]{0}', space=vmem, size = 0x30000, scoped, tag = 'input window, operand 1, single buffered']
    #allocation6 [shape = 's32[1]{0}', space=sflag, size = 0x4, scoped, tag = 'scoped memory for fc_forward.1']
    #allocation7 [shape = 'u8[4096]{0}', space=vmem, size = 0x1000, scoped, tag = 'input window, operand 2, single buffered']
    #allocation8 [shape = 'u8[4096]{0}', space=vmem, size = 0x1000, scoped, tag = 'output window, operand 0, single buffered']
    %8 = vsyncpa [#allocation3], 0
    %9 = vsyncpa [#allocation6], 0
    %10 = vsyncpa [#allocation4], 0
    // Predicated region
    $region2: #{fc_forward.1} parent=1 // pred_check
      _
    $region3: #{fc_forward.1} parent=1 // pred_check_branch
      %12 = sbr.rel (0) target = $region5
    $region4: #{fc_forward.1} parent=1 // pred_region
      %14 = vsyncadd [#allocation3], 0
      %s16 = sshll.u32 %s0, 4
      %s17 = int_to_ptr.hbm [resolvable:$true] %s16
      %s18 = sshll.u32 [#allocation2], 4
      %s19 = int_to_ptr.vmem [resolvable:$true] %s18
      %21 = dma.hbm_to_vmem [thread:$0]  %s17, 128, %s19, [#allocation3]
    $region5: #{fc_forward.1} parent=1 // pred_fallthru
      _
    // Predicated region
    $region6: #{fc_forward.1} parent=1 // pred_check
      _
    $region7: #{fc_forward.1} parent=1 // pred_check_branch
      %23 = sbr.rel (0) target = $region9
    $region8: #{fc_forward.1} parent=1 // pred_region
      %25 = vsyncadd [#allocation6], 0
      %s26 = sshll.u32 %s1, 4
      %s27 = int_to_ptr.hbm [resolvable:$true] %s26
      %s28 = sshll.u32 [#allocation5], 4
      %s29 = int_to_ptr.vmem [resolvable:$true] %s28
      %34 = dma.hbm_to_vmem [thread:$0]  %s27, 6144, %s29, [#allocation6], 128, 128, 8
    $region9: #{fc_forward.1} parent=1 // pred_fallthru
      _
    // Predicated region
    $region10: #{fc_forward.1} parent=1 // pred_check
      _
    $region11: #{fc_forward.1} parent=1 // pred_check_branch
      %36 = sbr.rel (0) target = $region13
    $region12: #{fc_forward.1} parent=1 // pred_region
      %38 = vsyncadd [#allocation6], 0
      %s40 = sshll.u32 %s2, 4
      %s41 = int_to_ptr.hbm [resolvable:$true] %s40
      %s42 = sshll.u32 [#allocation7], 4
      %s43 = int_to_ptr.vmem [resolvable:$true] %s42
      %45 = dma.hbm_to_vmem [thread:$0]  %s41, 128, %s43, [#allocation6]
    $region13: #{fc_forward.1} parent=1 // pred_fallthru
      _
    // Predicated region
    $region14: #{fc_forward.1} parent=1 // pred_check
      _
    $region15: #{fc_forward.1} parent=1 // pred_check_branch
      %47 = sbr.rel (0) target = $region17
    $region16: #{fc_forward.1} parent=1 // pred_region
      %49 = dma.done [#allocation3], 128
    $region17: #{fc_forward.1} parent=1 // pred_fallthru
      _
    // Predicated region
    $region18: #{fc_forward.1} parent=1 // pred_check
      _
    $region19: #{fc_forward.1} parent=1 // pred_check_branch
      %51 = sbr.rel (0) target = $region21
    $region20: #{fc_forward.1} parent=1 // pred_region
      %53 = dma.done [#allocation6], 6144
    $region21: #{fc_forward.1} parent=1 // pred_fallthru
      _
    // Predicated region
    $region22: #{fc_forward.1} parent=1 // pred_check
      _
    $region23: #{fc_forward.1} parent=1 // pred_check_branch
      %55 = sbr.rel (0) target = $region25
    $region24: #{fc_forward.1} parent=1 // pred_region
      %57 = dma.done [#allocation6], 128
    $region25: #{fc_forward.1} parent=1 // pred_fallthru
      _
    %v58 = vld [vmem:[#allocation7] sm:$0xff]
    %v59 = vld [vmem:[#allocation5] sm:$0xff]
    %v60 = vld [vmem:[#allocation5 + $0x8] sm:$0xff]
    %v61 = vld [vmem:[#allocation5 + $0x10] sm:$0xff]
    %v62 = vld [vmem:[#allocation5 + $0x18] sm:$0xff]
    %v63 = vld [vmem:[#allocation2] sm:$0xff]
    %v64 = vperm.slane %v58, 0
    %vm65 = vcmask 261120
    %v67 = vsel %vm65, %v63, 0
    %69 = vmatpush.msra.mxu0 0.0
    %70 = vmatpush.msra.mxu0 0.0
    %71 = vmatpush.msra.mxu0 0.0
    %72 = vmatpush.msra.mxu0 0.0
    %73 = vmatpush.msra.mxu0 0.0
    %74 = vmatpush.msra.mxu0 0.0
    %75 = vmatpush.msra.mxu0 0.0
    %76 = vmatpush.msra.mxu0 0.0
    %77 = vmatpush.msra.mxu0 0.0
    %78 = vmatpush.msra.mxu0 0.0
    %79 = vmatpush.msra.mxu0 0.0
    %80 = vmatpush.msra.mxu0 0.0
    %81 = vmatpush.msra.mxu0 %v62
    %82 = vmatpush.msra.mxu0 %v61
    %83 = vmatpush.msra.mxu0 %v60
    %84 = vmatpush.msra.mxu0 %v59
    %85 = vmatmul.f32.gmra.mxu0 %v67
    %v86 = vpop.f32.mrf.mxu0
    %v87 = vadd.f32 %v64, %v86
    %88 = vdwg.mxu0
    %v89 = vmax.f32 %v87, 0.0
    %s90 = scalar_lea.vmem [#allocation5], 128
    %v91 = vld [vmem:[%s90] sm:$0xff]
    %v92 = vld [vmem:[%s90 + $0x8] sm:$0xff]
    %v93 = vld [vmem:[%s90 + $0x10] sm:$0xff]
    %v94 = vld [vmem:[%s90 + $0x18] sm:$0xff]
    %v95 = vld [vmem:[%s90 + $0x20] sm:$0xff]
    %v96 = vld [vmem:[%s90 + $0x28] sm:$0xff]
    %v97 = vld [vmem:[%s90 + $0x30] sm:$0xff]
    %v98 = vld [vmem:[%s90 + $0x38] sm:$0xff]
    %v99 = vld [vmem:[%s90 + $0x40] sm:$0xff]
    %v100 = vld [vmem:[%s90 + $0x48] sm:$0xff]
    %v101 = vld [vmem:[%s90 + $0x50] sm:$0xff]
    %v102 = vld [vmem:[%s90 + $0x58] sm:$0xff]
    %v103 = vld [vmem:[%s90 + $0x60] sm:$0xff]
    %v104 = vld [vmem:[%s90 + $0x68] sm:$0xff]
    %v105 = vld [vmem:[%s90 + $0x70] sm:$0xff]
    %v106 = vld [vmem:[%s90 + $0x78] sm:$0xff]
    %v107 = vperm.slane %v58, 1
    %108 = vmatpush.msra.mxu0 %v106
    %109 = vmatpush.msra.mxu0 %v105
    %110 = vmatpush.msra.mxu0 %v104
    %111 = vmatpush.msra.mxu0 %v103
    %112 = vmatpush.msra.mxu0 %v102
    %113 = vmatpush.msra.mxu0 %v101
    %114 = vmatpush.msra.mxu0 %v100
    %115 = vmatpush.msra.mxu0 %v99
    %116 = vmatpush.msra.mxu0 %v98
    %117 = vmatpush.msra.mxu0 %v97
    %118 = vmatpush.msra.mxu0 %v96
    %119 = vmatpush.msra.mxu0 %v95
    %120 = vmatpush.msra.mxu0 %v94
    %121 = vmatpush.msra.mxu0 %v93
    %122 = vmatpush.msra.mxu0 %v92
    %123 = vmatpush.msra.mxu0 %v91
    %124 = vmatmul.f32.gmra.mxu0 %v89
    %v125 = vpop.f32.mrf.mxu0
    %v126 = vadd.f32 %v107, %v125
    %127 = vdwg.mxu0
    %v128 = vmax.f32 %v126, 0.0
    %s129 = scalar_lea.vmem [#allocation5], 256
    %v130 = vld [vmem:[%s129] sm:$0xff]
    %v131 = vld [vmem:[%s129 + $0x8] sm:$0xff]
    %v132 = vld [vmem:[%s129 + $0x10] sm:$0xff]
    %v133 = vld [vmem:[%s129 + $0x18] sm:$0xff]
    %v134 = vld [vmem:[%s129 + $0x20] sm:$0xff]
    %v135 = vld [vmem:[%s129 + $0x28] sm:$0xff]
    %v136 = vld [vmem:[%s129 + $0x30] sm:$0xff]
    %v137 = vld [vmem:[%s129 + $0x38] sm:$0xff]
    %v138 = vld [vmem:[%s129 + $0x40] sm:$0xff]
    %v139 = vld [vmem:[%s129 + $0x48] sm:$0xff]
    %v140 = vld [vmem:[%s129 + $0x50] sm:$0xff]
    %v141 = vld [vmem:[%s129 + $0x58] sm:$0xff]
    %v142 = vld [vmem:[%s129 + $0x60] sm:$0xff]
    %v143 = vld [vmem:[%s129 + $0x68] sm:$0xff]
    %v144 = vld [vmem:[%s129 + $0x70] sm:$0xff]
    %v145 = vld [vmem:[%s129 + $0x78] sm:$0xff]
    %v146 = vperm.slane %v58, 2
    %147 = vmatpush.msra.mxu0 %v145
    %148 = vmatpush.msra.mxu0 %v144
    %149 = vmatpush.msra.mxu0 %v143
    %150 = vmatpush.msra.mxu0 %v142
    %151 = vmatpush.msra.mxu0 %v141
    %152 = vmatpush.msra.mxu0 %v140
    %153 = vmatpush.msra.mxu0 %v139
    %154 = vmatpush.msra.mxu0 %v138
    %155 = vmatpush.msra.mxu0 %v137
    %156 = vmatpush.msra.mxu0 %v136
    %157 = vmatpush.msra.mxu0 %v135
    %158 = vmatpush.msra.mxu0 %v134
    %159 = vmatpush.msra.mxu0 %v133
    %160 = vmatpush.msra.mxu0 %v132
    %161 = vmatpush.msra.mxu0 %v131
    %162 = vmatpush.msra.mxu0 %v130
    %163 = vmatmul.f32.gmra.mxu0 %v128
    %v164 = vpop.f32.mrf.mxu0
    %v165 = vadd.f32 %v146, %v164
    %166 = vdwg.mxu0
    %v167 = vmax.f32 %v165, 0.0
    %vm168 = vcmask 130048
    %169 = vst.msk [vmem:[#allocation8] sm:$0xff] %vm168, %v167
    // Predicated region
    $region26: #{fc_forward.1} parent=1 // pred_check
      _
    $region27: #{fc_forward.1} parent=1 // pred_check_branch
      %171 = sbr.rel (0) target = $region29
    $region28: #{fc_forward.1} parent=1 // pred_region
      %173 = vsyncadd [#allocation4], 0
      %s175 = sshll.u32 [#allocation8], 4
      %s176 = int_to_ptr.vmem [resolvable:$true] %s175
      %s177 = sshll.u32 %s3, 4
      %s178 = int_to_ptr.hbm [resolvable:$true] %s177
      %180 = dma.vmem_to_hbm [thread:$0]  %s176, 128, %s178, [#allocation4]
    $region29: #{fc_forward.1} parent=1 // pred_fallthru
      _
    // Predicated region
    $region30: #{fc_forward.1} parent=1 // pred_check
      _
    $region31: #{fc_forward.1} parent=1 // pred_check_branch
      %182 = sbr.rel (0) target = $region33
    $region32: #{fc_forward.1} parent=1 // pred_region
      %184 = dma.done [#allocation4], 128
    $region33: #{fc_forward.1} parent=1 // pred_fallthru
      _
    %185 = vsyncpa [#allocation3], 1
    %186 = vsyncpa [#allocation6], 1
    %187 = vsyncpa [#allocation4], 1

</llo_original>
